<compile_context>
chip_gen: v7x
topology: tpu7x:2x2x1
jax: 0.10.0
libtpu: 0.0.40
codegen_flags: <defaults>
</compile_context>

<pallas_src>
import jax
import jax.numpy as jnp
from jax.experimental import pallas as pl
from jax.experimental.pallas import tpu as pltpu

EPS = 1e-6
_MiB = 1024 * 1024
_SUBLANE = 8
# Only request single-buffered resident W when double-buffering it would
# actually cost meaningful VMEM.
_W_SINGLE_BUFFER_MIN_BYTES = 4 * _MiB


def _vmem_budget_bytes():
    """Generation-aware scoped-VMEM budget (v5e/v6e: 128 MiB, v7x: 64 MiB)."""
    phys = 128 * _MiB
    try:
        phys = int(pltpu.get_tpu_info().vmem_capacity_bytes)
    except Exception:
        pass
    if phys <= 64 * _MiB:
        # v7x-class: 64 MiB per TC; leave headroom for compiler scratch.
        budget = min(phys - 16 * _MiB, 48 * _MiB)
    else:
        # v5e/v6e-class: the scoped default (16/32 MiB) is far too small for a
        # resident weight, so raise toward ~100 MiB of the 128 MiB physical.
        budget = min(phys - 28 * _MiB, 100 * _MiB)
    return max(budget, 16 * _MiB)


def _round_rows(r):
    return max(_SUBLANE, (r // _SUBLANE) * _SUBLANE)


def _footprint_bytes(tile_rows, tile_n, D, in_bytes, resident, w_single):
    """Conservative VMEM footprint estimate for one (tile_rows, tile_n) config."""
    w_copies = (1 if w_single else 2) if resident else 2
    w_cols = D if resident else tile_n
    return (w_copies * D * w_cols * 2            # bf16 W block(s)
            + 2 * tile_rows * D * in_bytes       # double-buffered x row tile
            + 2 * tile_rows * tile_n * in_bytes  # double-buffered out tile
            + tile_rows * D * 2                  # bf16 normed scratch
            + 2 * tile_rows * D * 4              # f32 LayerNorm temps
            + 8 * D * 4)                         # a_2 / b_2 / bias


def _plan_tiles(rows, D, in_bytes, budget, w_single):
    """Pick (tile_rows, tile_n, resident_w) under the VMEM budget.

    Prefer a fully VMEM-resident W (fetched from HBM exactly once) at a
    reasonably large row tile; otherwise fall back to 256-wide output-column
    tiling of W with the largest row tile that fits.
    """
    col_tile = 256 if (D > 256 and D % 256 == 0) else D

    def clamp(tr):
        tr = min(tr, rows)
        return tr if tr == rows else _round_rows(tr)

    for cand in (1024, 512, 256):
        tr = clamp(cand)
        if _footprint_bytes(tr, D, D, in_bytes, True, w_single) <= budget:
            return tr, D, True
    for cand in (1024, 512, 256, 128, 64, 32, 16, 8):
        tr = clamp(cand)
        if _footprint_bytes(tr, col_tile, D, in_bytes, False, False) <= budget:
            return tr, col_tile, False
    return clamp(8), col_tile, False


def _make_kernel(D, tile_n, grid_n):
    inv_nm1 = 1.0 / max(D - 1, 1)

    def kernel(x_ref, a2_ref, b2_ref, w_ref, bw_ref, o_ref, normed_ref):
        j = pl.program_id(1)

        # --- LayerNorm, hoisted: once per row tile (j == 0), cached as bf16
        #     in a persistent VMEM scratch for all output-column steps. ---
        @pl.when(j == 0)
        def _():
            x = x_ref[...].astype(jnp.float32)
            mean = jnp.mean(x, axis=-1, keepdims=True)
            diff = x - mean
            # Two-pass unbiased variance (numerically stable); eps on std.
            var_unbiased = jnp.sum(diff * diff, axis=-1, keepdims=True) * inv_nm1
            std = jnp.sqrt(var_unbiased)
            inv = pl.reciprocal(std + EPS, approx=False)
            normed_ref[...] = (a2_ref[...] * diff * inv
                               + b2_ref[...]).astype(jnp.bfloat16)

        # --- sublayer: Linear(D, D) column tile, bf16 MXU path, f32 acc. ---
        y = jnp.dot(normed_ref[...], w_ref[...],
                    preferred_element_type=jnp.float32)
        y = y + bw_ref[...]

        # --- dropout (eval mode) -> identity; residual add. ---
        if grid_n == 1:
            x_res = x_ref[...]
        else:
            col0 = pl.multiple_of(j * tile_n, tile_n)
            x_res = x_ref[:, pl.ds(col0, tile_n)]

        o_ref[...] = (x_res.astype(jnp.float32) + y).astype(o_ref.dtype)

    return kernel


def sublayer_connection(x, a_2, b_2, w, b_w, *, tile_rows=None):
    """x: [B, S, D]; a_2, b_2, b_w: [D]; w: [D, D]."""
    B, S, D = x.shape
    rows = B * S
    x2 = x.reshape(rows, D)
    in_bytes = x2.dtype.itemsize

    budget = _vmem_budget_bytes()
    w_single = (hasattr(pl, "Buffered")
                and D * D * 2 >= _W_SINGLE_BUFFER_MIN_BYTES)

    plan_rows, tile_n, resident = _plan_tiles(rows, D, in_bytes, budget, w_single)
    if tile_rows is not None:
        plan_rows = min(tile_rows, rows)
        if plan_rows < rows:
            plan_rows = _round_rows(plan_rows)
    tile_rows = plan_rows
    grid_m = pl.cdiv(rows, tile_rows)
    grid_n = pl.cdiv(D, tile_n)

    a2 = a_2.reshape(1, D).astype(jnp.float32)
    b2 = b_2.reshape(1, D).astype(jnp.float32)
    bw = b_w.reshape(1, D).astype(jnp.float32)
    wq = w.astype(jnp.bfloat16)                            # bf16 MXU fast path

    if resident:
        # Constant block index -> W is DMA'd from HBM exactly once and stays
        # resident in VMEM across every row tile.
        if w_single:
            w_spec = pl.BlockSpec((D, D), lambda i, j: (0, 0),
                                  pipeline_mode=pl.Buffered(1))
        else:
            w_spec = pl.BlockSpec((D, D), lambda i, j: (0, 0))
    else:
        w_spec = pl.BlockSpec((D, tile_n), lambda i, j: (0, j))

    need = _footprint_bytes(tile_rows, tile_n, D, in_bytes, resident,
                            resident and w_single)
    vmem_limit = int(min(budget, max(int(need * 1.5), 16 * _MiB)))

    w_hbm_reads = 1 if resident else grid_m
    cost = pl.CostEstimate(
        flops=2 * rows * D * D,
        transcendentals=2 * rows,                          # sqrt + reciprocal
        bytes_accessed=(2 * rows * D * in_bytes            # x in + out
                        + w_hbm_reads * D * D * 2          # bf16 W (re-)reads
                        + 3 * D * 4),                      # a_2 / b_2 / bias
    )

    out = pl.pallas_call(
        _make_kernel(D, tile_n, grid_n),
        out_shape=jax.ShapeDtypeStruct((rows, D), x.dtype),
        grid_spec=pltpu.PrefetchScalarGridSpec(
            num_scalar_prefetch=0,
            grid=(grid_m, grid_n),
            in_specs=[
                pl.BlockSpec((tile_rows, D), lambda i, j: (i, 0)),   # x rows
                pl.BlockSpec((1, D), lambda i, j: (0, 0)),           # a_2
                pl.BlockSpec((1, D), lambda i, j: (0, 0)),           # b_2
                w_spec,                                              # W
                pl.BlockSpec((1, tile_n), lambda i, j: (0, j)),      # bias
            ],
            out_specs=pl.BlockSpec((tile_rows, tile_n), lambda i, j: (i, j)),
            scratch_shapes=[pltpu.VMEM((tile_rows, D), jnp.bfloat16)],
        ),
        compiler_params=pltpu.CompilerParams(
            # Rows parallel (megacore sharding on v7x); columns arbitrary
            # because the hoisted-LN scratch is carried across that axis.
            dimension_semantics=("parallel", "arbitrary"),
            vmem_limit_bytes=vmem_limit),
        cost_estimate=cost,
    )(x2, a2, b2, wq, bw)
    return out.reshape(B, S, D)


def _reference(x, a_2, b_2, w, b_w):
    xf = x.astype(jnp.float32)
    mean = jnp.mean(xf, axis=-1, keepdims=True)
    diff = xf - mean
    var_unbiased = jnp.sum(diff * diff, axis=-1, keepdims=True) / (x.shape[-1] - 1)
    std = jnp.sqrt(var_unbiased)
    normed = a_2 * diff / (std + EPS) + b_2
    y = normed @ w.astype(jnp.float32) + b_w
    return (xf + y).astype(x.dtype)


if __name__ == "__main__":
    B, S, D = 2, 8, 32
    key = jax.random.PRNGKey(0)
    kx, kw, kb = jax.random.split(key, 3)

    x = jax.random.normal(kx, (B, S, D), dtype=jnp.float32)

    # LayerNorm parameters exactly as in __init__: ones / zeros.
    a_2 = jnp.ones((D,), jnp.float32)
    b_2 = jnp.zeros((D,), jnp.float32)

    # Deterministic synthetic sublayer (Linear(D, D)).
    w = jax.random.normal(kw, (D, D), dtype=jnp.float32) * (1.0 / jnp.sqrt(D))
    b_w = jax.random.normal(kb, (D,), dtype=jnp.float32) * 0.01

    out = sublayer_connection(x, a_2, b_2, w, b_w)
    out = jax.block_until_ready(out)

    ref = _reference(x, a_2, b_2, w, b_w)
    assert out.shape == (B, S, D)
    # Tolerance reflects the bf16 MXU path for the sublayer matmul (LayerNorm
    # itself is exact f32 now: two-pass variance + exact reciprocal).
    assert jnp.allclose(out, ref, atol=5e-2, rtol=5e-2), "mismatch vs reference"

    print("KERNEL_OK")
</pallas_src>

<mosaic_0001>
module attributes {stable_mosaic.version = 11 : i64} {
  func.func @kernel(%arg0: i32, %arg1: i32, %arg2: memref<16x32xf32, #tpu.memory_space<vmem>>, %arg3: memref<1x32xf32, #tpu.memory_space<vmem>>, %arg4: memref<1x32xf32, #tpu.memory_space<vmem>>, %arg5: memref<32x32xbf16, #tpu.memory_space<vmem>>, %arg6: memref<1x32xf32, #tpu.memory_space<vmem>>, %arg7: memref<16x32xf32, #tpu.memory_space<vmem>>, %arg8: memref<16x32xbf16, #tpu.memory_space<vmem>>) attributes {dimension_semantics = [#tpu.dimension_semantics<parallel>, #tpu.dimension_semantics<arbitrary>], iteration_bounds = array<i64: 1, 1>, scalar_prefetch = 0 : i64, scratch_operands = 1 : i64, tpu.core_type = #tpu.core_type<tc>, window_params = [{transform_indices = @transform_0, window_bounds = array<i64: 16, 32>}, {pipeline_mode = #tpu.pipeline_mode<synchronous>, transform_indices = @transform_1, window_bounds = array<i64: 1, 32>}, {pipeline_mode = #tpu.pipeline_mode<synchronous>, transform_indices = @transform_2, window_bounds = array<i64: 1, 32>}, {pipeline_mode = #tpu.pipeline_mode<synchronous>, transform_indices = @transform_3, window_bounds = array<i64: 32, 32>}, {transform_indices = @transform_4, window_bounds = array<i64: 1, 32>}, {transform_indices = @transform_5, window_bounds = array<i64: 16, 32>}]} {
    %c0_i32 = arith.constant 0 : i32
    %0 = arith.cmpi eq, %arg1, %c0_i32 : i32
    %1 = arith.extui %0 : i1 to i32
    %c0_i32_0 = arith.constant 0 : i32
    %2 = arith.cmpi ne, %1, %c0_i32_0 : i32
    scf.if %2 {
      %c0_10 = arith.constant 0 : index
      %c0_11 = arith.constant 0 : index
      %12 = vector.load %arg2[%c0_10, %c0_11] : memref<16x32xf32, #tpu.memory_space<vmem>>, vector<16x32xf32>
      %cst_12 = arith.constant dense<0.000000e+00> : vector<16xf32>
      %13 = vector.multi_reduction <add>, %12, %cst_12 [1] : vector<16x32xf32> to vector<16xf32>
      %14 = vector.shape_cast %13 : vector<16xf32> to vector<16x1xf32>
      %cst_13 = arith.constant 3.200000e+01 : f32
      %15 = vector.broadcast %cst_13 : f32 to vector<16x1xf32>
      %16 = arith.divf %14, %15 : vector<16x1xf32>
      %17 = vector.broadcast %16 : vector<16x1xf32> to vector<16x32xf32>
      %18 = arith.subf %12, %17 : vector<16x32xf32>
      %19 = arith.mulf %18, %18 : vector<16x32xf32>
      %cst_14 = arith.constant dense<0.000000e+00> : vector<16xf32>
      %20 = vector.multi_reduction <add>, %19, %cst_14 [1] : vector<16x32xf32> to vector<16xf32>
      %21 = vector.shape_cast %20 : vector<16xf32> to vector<16x1xf32>
      %cst_15 = arith.constant 0.0322580636 : f32
      %22 = vector.broadcast %cst_15 : f32 to vector<16x1xf32>
      %23 = arith.mulf %21, %22 : vector<16x1xf32>
      %24 = math.sqrt %23 : vector<16x1xf32>
      %cst_16 = arith.constant 9.99999997E-7 : f32
      %25 = vector.broadcast %cst_16 : f32 to vector<16x1xf32>
      %26 = arith.addf %24, %25 : vector<16x1xf32>
      %27 = tpu.reciprocal %26 : vector<16x1xf32> -> vector<16x1xf32>
      %c0_17 = arith.constant 0 : index
      %c0_18 = arith.constant 0 : index
      %28 = vector.load %arg3[%c0_17, %c0_18] : memref<1x32xf32, #tpu.memory_space<vmem>>, vector<1x32xf32>
      %29 = vector.broadcast %28 : vector<1x32xf32> to vector<16x32xf32>
      %30 = arith.mulf %29, %18 : vector<16x32xf32>
      %31 = vector.broadcast %27 : vector<16x1xf32> to vector<16x32xf32>
      %32 = arith.mulf %30, %31 : vector<16x32xf32>
      %c0_19 = arith.constant 0 : index
      %c0_20 = arith.constant 0 : index
      %33 = vector.load %arg4[%c0_19, %c0_20] : memref<1x32xf32, #tpu.memory_space<vmem>>, vector<1x32xf32>
      %34 = vector.broadcast %33 : vector<1x32xf32> to vector<16x32xf32>
      %35 = arith.addf %32, %34 : vector<16x32xf32>
      %36 = arith.truncf %35 : vector<16x32xf32> to vector<16x32xbf16>
      %c0_21 = arith.constant 0 : index
      %c0_22 = arith.constant 0 : index
      %37 = vector.load %arg8[%c0_21, %c0_22] : memref<16x32xbf16, #tpu.memory_space<vmem>>, vector<16x32xbf16>
      tpu.vector_store %arg8[%c0_21, %c0_22], %36 {strides = array<i32>} : memref<16x32xbf16, #tpu.memory_space<vmem>>, vector<16x32xbf16>,
    } else {
    }
    %c0 = arith.constant 0 : index
    %c0_1 = arith.constant 0 : index
    %3 = vector.load %arg8[%c0, %c0_1] : memref<16x32xbf16, #tpu.memory_space<vmem>>, vector<16x32xbf16>
    %c0_2 = arith.constant 0 : index
    %c0_3 = arith.constant 0 : index
    %4 = vector.load %arg5[%c0_2, %c0_3] : memref<32x32xbf16, #tpu.memory_space<vmem>>, vector<32x32xbf16>
    %cst = arith.constant dense<0.000000e+00> : vector<16x32xf32>
    %5 = tpu.matmul %3, %4, %cst {dimension_numbers = #tpu.dot_dimension_numbers<[1], [0], [0], [1], [0, 0, 1, 1], [], []>} : vector<16x32xbf16>, vector<32x32xbf16>, vector<16x32xf32> -> vector<16x32xf32>
    %c0_4 = arith.constant 0 : index
    %c0_5 = arith.constant 0 : index
    %6 = vector.load %arg6[%c0_4, %c0_5] : memref<1x32xf32, #tpu.memory_space<vmem>>, vector<1x32xf32>
    %7 = vector.broadcast %6 : vector<1x32xf32> to vector<16x32xf32>
    %8 = arith.addf %5, %7 : vector<16x32xf32>
    %c0_6 = arith.constant 0 : index
    %c0_7 = arith.constant 0 : index
    %9 = vector.load %arg2[%c0_6, %c0_7] : memref<16x32xf32, #tpu.memory_space<vmem>>, vector<16x32xf32>
    %10 = arith.addf %9, %8 : vector<16x32xf32>
    %c0_8 = arith.constant 0 : index
    %c0_9 = arith.constant 0 : index
    %11 = vector.load %arg7[%c0_8, %c0_9] : memref<16x32xf32, #tpu.memory_space<vmem>>, vector<16x32xf32>
    tpu.vector_store %arg7[%c0_8, %c0_9], %10 {strides = array<i32>} : memref<16x32xf32, #tpu.memory_space<vmem>>, vector<16x32xf32>,
    return
  }
  func.func @transform_0(%arg0: i32, %arg1: i32) -> (i32, i32) {
    %c0_i32 = arith.constant 0 : i32
    %c0_i32_0 = arith.constant 0 : i32
    return %arg0, %c0_i32 : i32, i32
  }
  func.func @transform_1(%arg0: i32, %arg1: i32) -> (i32, i32) {
    %c0_i32 = arith.constant 0 : i32
    %c0_i32_0 = arith.constant 0 : i32
    %c0_i32_1 = arith.constant 0 : i32
    return %c0_i32, %c0_i32_0 : i32, i32
  }
  func.func @transform_2(%arg0: i32, %arg1: i32) -> (i32, i32) {
    %c0_i32 = arith.constant 0 : i32
    %c0_i32_0 = arith.constant 0 : i32
    %c0_i32_1 = arith.constant 0 : i32
    return %c0_i32, %c0_i32_0 : i32, i32
  }
  func.func @transform_3(%arg0: i32, %arg1: i32) -> (i32, i32) {
    %c0_i32 = arith.constant 0 : i32
    %c0_i32_0 = arith.constant 0 : i32
    %c0_i32_1 = arith.constant 0 : i32
    return %c0_i32, %c0_i32_0 : i32, i32
  }
  func.func @transform_4(%arg0: i32, %arg1: i32) -> (i32, i32) {
    %c0_i32 = arith.constant 0 : i32
    %c0_i32_0 = arith.constant 0 : i32
    return %c0_i32, %arg1 : i32, i32
  }
  func.func @transform_5(%arg0: i32, %arg1: i32) -> (i32, i32) {
    %c0_i32 = arith.constant 0 : i32
    return %arg0, %arg1 : i32, i32
  }
}

</mosaic_0001>

<llo_original>
// kernel: tpu_custom_call.1
$region0: #{tpu_custom_call.1}
  #allocation0 [shape = 'u32[]', space=smem, size = 0x4, offset = 0x4, fixed_abs, tag = 'smem constant byte address 0x4 - core index']
  #allocation1 [shape = 'u32[144,128]{1,0:T(1,128)}', space=vmem, size = 0x12000, scoped, tag = 'internal scratch']
  #allocation2 [shape = 'bf16[16,32]{1,0:T(16,128)(2,1)}', space=vmem, size = 0x1000, scoped, tag = 'scratch operand']
  %s0 = inlined_call_operand.hbm [shape: f32[16,32], index: 0, kind: input, shape index: {}]
  %s1 = inlined_call_operand.vmem [shape: f32[1,32], index: 1, kind: input, shape index: {}]
  %s2 = inlined_call_operand.vmem [shape: f32[1,32], index: 2, kind: input, shape index: {}]
  %s3 = inlined_call_operand.hbm [shape: bf16[32,32], index: 3, kind: input, shape index: {}]
  %s4 = inlined_call_operand.vmem [shape: f32[1,32], index: 4, kind: input, shape index: {}]
  %s5 = inlined_call_operand.hbm [shape: f32[16,32], index: 5, kind: output, shape index: {}]
  %s6 = sld [smem:[#allocation0]]
  $region42: #{tpu_custom_call.1} parent=0
    _
  %s8 = ssub.s32 1, %s6
  %s9 = scalar_select 0, %s8, %s6
  $region1: #{tpu_custom_call.1} parent=0
    #allocation3 [shape = 'u8[8192]{0}', space=vmem, size = 0x2000, scoped, tag = 'input window, operand 0, single buffered']
    #allocation4 [shape = 's32[1]{0}', space=sflag, size = 0x4, scoped, tag = 'scoped memory for tpu_custom_call.1']
    #allocation5 [shape = 's32[1]{0}', space=sflag, size = 0x4, scoped, tag = 'scoped memory for tpu_custom_call.1']
    #allocation6 [shape = 'u8[8192]{0}', space=vmem, size = 0x2000, scoped, tag = 'input window, operand 3, single buffered']
    #allocation7 [shape = 's32[1]{0}', space=sflag, size = 0x4, scoped, tag = 'scoped memory for tpu_custom_call.1']
    #allocation8 [shape = 'u8[8192]{0}', space=vmem, size = 0x2000, scoped, tag = 'output window, operand 0, single buffered']
    %10 = vsyncpa [#allocation4], 0
    %11 = vsyncpa [#allocation7], 0
    %12 = vsyncpa [#allocation5], 0
    // Predicated region
    $region2: #{tpu_custom_call.1} parent=1 // pred_check
      _
    $region3: #{tpu_custom_call.1} parent=1 // pred_check_branch
      %14 = sbr.rel (0) target = $region5
    $region4: #{tpu_custom_call.1} parent=1 // pred_region
      %s16 = ssub.s32 256, 256
      %17 = vsyncadd [#allocation4], %s16
      %s18 = sshll.u32 [#allocation3], 4
      %s19 = int_to_ptr.vmem [resolvable:$true] %s18
      %24 = dma.hbm_to_vmem [thread:$0]  %s0, 256, %s19, [#allocation4], 128, 128, 8
    $region5: #{tpu_custom_call.1} parent=1 // pred_fallthru
      _
    // Predicated region
    $region6: #{tpu_custom_call.1} parent=1 // pred_check
      _
    $region7: #{tpu_custom_call.1} parent=1 // pred_check_branch
      %26 = sbr.rel (0) target = $region9
    $region8: #{tpu_custom_call.1} parent=1 // pred_region
      _
    $region9: #{tpu_custom_call.1} parent=1 // pred_fallthru
      _
    // Predicated region
    $region10: #{tpu_custom_call.1} parent=1 // pred_check
      _
    $region11: #{tpu_custom_call.1} parent=1 // pred_check_branch
      %28 = sbr.rel (0) target = $region13
    $region12: #{tpu_custom_call.1} parent=1 // pred_region
      _
    $region13: #{tpu_custom_call.1} parent=1 // pred_fallthru
      _
    // Predicated region
    $region14: #{tpu_custom_call.1} parent=1 // pred_check
      _
    $region15: #{tpu_custom_call.1} parent=1 // pred_check_branch
      %30 = sbr.rel (0) target = $region17
    $region16: #{tpu_custom_call.1} parent=1 // pred_region
      %s32 = ssub.s32 256, 256
      %33 = vsyncadd [#allocation7], %s32
      %s34 = sshll.u32 [#allocation6], 4
      %s35 = int_to_ptr.vmem [resolvable:$true] %s34
      %40 = dma.hbm_to_vmem [thread:$0]  %s3, 256, %s35, [#allocation7], 64, 64, 4
    $region17: #{tpu_custom_call.1} parent=1 // pred_fallthru
      _
    // Predicated region
    $region18: #{tpu_custom_call.1} parent=1 // pred_check
      _
    $region19: #{tpu_custom_call.1} parent=1 // pred_check_branch
      %42 = sbr.rel (0) target = $region21
    $region20: #{tpu_custom_call.1} parent=1 // pred_region
      _
    $region21: #{tpu_custom_call.1} parent=1 // pred_fallthru
      _
    // Predicated region
    $region22: #{tpu_custom_call.1} parent=1 // pred_check
      _
    $region23: #{tpu_custom_call.1} parent=1 // pred_check_branch
      %44 = sbr.rel (0) target = $region25
    $region24: #{tpu_custom_call.1} parent=1 // pred_region
      %45 = dma.done [#allocation4], 256
    $region25: #{tpu_custom_call.1} parent=1 // pred_fallthru
      _
    // Predicated region
    $region26: #{tpu_custom_call.1} parent=1 // pred_check
      _
    $region27: #{tpu_custom_call.1} parent=1 // pred_check_branch
      %47 = sbr.rel (0) target = $region29
    $region28: #{tpu_custom_call.1} parent=1 // pred_region
      %48 = dma.done [#allocation7], 256
    $region29: #{tpu_custom_call.1} parent=1 // pred_fallthru
      _
    %p50 = scmp.eq.s32.totalorder 0, 0
    // Predicated region
    $region30: #{tpu_custom_call.1} parent=1 // pred_check
      %p51 = pneg %p50
    $region31: #{tpu_custom_call.1} parent=1 // pred_check_branch
      %53 = sbr.rel (%p51) target = $region33
    $region32: #{tpu_custom_call.1} parent=1 // pred_region
      %v54 = vld [vmem:[#allocation3] sm:$0xff]
      %v55 = vld [vmem:[#allocation3 + $0x8] sm:$0xff]
      %vm56 = vcmask 261120
      %v57 = vsel %vm56, %v54, 0.0
      %58 = vadd.xlane.f32.xlu0 %v57
      %v59 = vpop.xlane.xlu0 %58
      %v60 = vsel %vm56, %v55, 0.0
      %61 = vadd.xlane.f32.xlu0 %v60
      %v62 = vpop.xlane.xlu0 %61
      %v63 = vrcp.pop 32.0
      %v64 = vmul.f32 %v59, %v63
      %v65 = vmul.f32 %v62, %v63
      %v66 = vsub.f32 %v54, %v64
      %v67 = vsub.f32 %v55, %v65
      %v68 = vmul.f32 %v66, %v66
      %v69 = vmul.f32 %v67, %v67
      %v70 = vsel %vm56, %v68, 0.0
      %71 = vadd.xlane.f32.xlu0 %v70
      %v72 = vpop.xlane.xlu0 %71
      %v73 = vsel %vm56, %v69, 0.0
      %74 = vadd.xlane.f32.xlu0 %v73
      %v75 = vpop.xlane.xlu0 %74
      %v76 = vmul.f32 %v72, 0.032258064
      %v77 = vmul.f32 %v75, 0.032258064
      %v78 = vrsqrt.pop %v76
      %v79 = vmul.f32 %v76, %v78
      %vm80 = vcmp.eq.f32.partialorder %v76, inf
      %v81 = vsel %vm80, %v76, %v79
      %vm82 = vcmp.eq.f32.partialorder %v76, 0.0
      %v83 = vand.u32 %v76, 2147483648
      %v84 = vsel %vm82, %v83, %v81
      %v85 = vrsqrt.pop %v77
      %v86 = vmul.f32 %v77, %v85
      %vm87 = vcmp.eq.f32.partialorder %v77, inf
      %v88 = vsel %vm87, %v77, %v86
      %vm89 = vcmp.eq.f32.partialorder %v77, 0.0
      %v90 = vand.u32 %v77, 2147483648
      %v91 = vsel %vm89, %v90, %v88
      %v92 = vadd.f32 %v84, 1e-06
      %v93 = vadd.f32 %v91, 1e-06
      %v94 = vrcp.pop %v92
      %v95 = vrcp.pop %v93
      %v96 = vld [vmem:[%s1] sm:$0x1]
      %v98 = vlaneseq
      %v99 = vshrl.u32 %v98, 7
      %v100 = vsub.s32 0, %v99
      %v101 = vrot.slane %v96, %v100
      %v103 = vmul.f32 %v101, %v66
      %v104 = vmul.f32 %v101, %v67
      %v105 = vmul.f32 %v103, %v94
      %v106 = vmul.f32 %v104, %v95
      %v107 = vld [vmem:[%s2] sm:$0x1]
      %v109 = vlaneseq
      %v110 = vshrl.u32 %v109, 7
      %v111 = vsub.s32 0, %v110
      %v112 = vrot.slane %v107, %v111
      %v114 = vadd.f32 %v105, %v112
      %v115 = vadd.f32 %v106, %v112
      %v116 = vpack.c.bf16 %v115, %v114
      %117 = vst.msk [vmem:[#allocation2] sm:$0xff] %vm56, %v116
    $region33: #{tpu_custom_call.1} parent=1 // pred_fallthru
      _
    %v118 = vld [vmem:[#allocation2] sm:$0xff]
    %v119 = vld [vmem:[#allocation6] sm:$0xf]
    %v120 = vld [vmem:[#allocation6 + $0x4] sm:$0xf]
    %v121 = vld [vmem:[#allocation6 + $0x8] sm:$0xf]
    %v122 = vld [vmem:[#allocation6 + $0xc] sm:$0xf]
    %v123 = vld [vmem:[%s4] sm:$0x1]
    %v125 = vlaneseq
    %v126 = vshrl.u32 %v125, 7
    %v127 = vsub.s32 0, %v126
    %v128 = vrot.slane %v123, %v127
    %v134 = vunpack.c.l.b16 %v119
    %v135 = vunpack.c.l.b16 %v120
    %v136 = vunpack.c.l.b16 %v121
    %v137 = vunpack.c.l.b16 %v122
    %v138 = vpack.c.b16 %v135, %v134
    %v139 = vpack.c.b16 %v137, %v136
    %vm142 = vcmask 261120
    %v144 = vsel %vm142, %v118, 0
    %146 = vmatprep.subr.bf16.mxu0 0
    %147 = vmatpush1.bf16.msra.mxu0 %v138
    %148 = vmatprep.subr.bf16.mxu0 0
    %149 = vmatpush1.bf16.msra.mxu0 %v139
    %150 = vmatprep.subr.bf16.mxu0 0
    %151 = vmatpush1.bf16.msra.mxu0 0
    %152 = vmatprep.subr.bf16.mxu0 0
    %153 = vmatpush1.bf16.msra.mxu0 0
    %154 = vmatprep.subr.bf16.mxu0 0
    %155 = vmatpush1.bf16.msra.mxu0 0
    %156 = vmatprep.subr.bf16.mxu0 0
    %157 = vmatpush1.bf16.msra.mxu0 0
    %158 = vmatprep.subr.bf16.mxu0 0
    %159 = vmatpush1.bf16.msra.mxu0 0
    %160 = vmatprep.subr.bf16.mxu0 0
    %161 = vmatpush1.bf16.msra.mxu0 0
    %162 = vmatprep.subr.bf16.mxu0 0
    %163 = vmatpush1.bf16.msra.mxu0 0
    %164 = vmatprep.subr.bf16.mxu0 0
    %165 = vmatpush1.bf16.msra.mxu0 0
    %166 = vmatprep.subr.bf16.mxu0 0
    %167 = vmatpush1.bf16.msra.mxu0 0
    %168 = vmatprep.subr.bf16.mxu0 0
    %169 = vmatpush1.bf16.msra.mxu0 0
    %170 = vmatprep.subr.bf16.mxu0 0
    %171 = vmatpush1.bf16.msra.mxu0 0
    %172 = vmatprep.subr.bf16.mxu0 0
    %173 = vmatpush1.bf16.msra.mxu0 0
    %174 = vmatprep.subr.bf16.mxu0 0
    %175 = vmatpush1.bf16.msra.mxu0 0
    %176 = vmatprep.subr.bf16.mxu0 0
    %177 = vmatpush1.bf16.msra.mxu0 0
    %178 = vmatprep.mubr.bf16.mxu0 0
    %179 = vmatmul.mubr.bf16.gmra.mrb[0].mxu0 %v144
    %v180 = vpop.f32.mrb[0].mxu0
    %v181 = vadd.f32 %v128, %v180
    %v182 = vpop.f32.mrb[0].mxu0
    %v183 = vpop.f32.mrb[0].mxu0
    %v184 = vadd.f32 %v128, %v183
    %v185 = vpop.f32.mrb[0].mxu0
    %186 = vdwg.mxu0
    %v187 = vld [vmem:[#allocation3] sm:$0xff]
    %v188 = vld [vmem:[#allocation3 + $0x8] sm:$0xff]
    %v189 = vadd.f32 %v187, %v181
    %v190 = vadd.f32 %v188, %v184
    %191 = vst.msk [vmem:[#allocation8] sm:$0xff] %vm142, %v189
    %192 = vst.msk [vmem:[#allocation8 + $0x8] sm:$0xff] %vm142, %v190
    // Predicated region
    $region34: #{tpu_custom_call.1} parent=1 // pred_check
      _
    $region35: #{tpu_custom_call.1} parent=1 // pred_check_branch
      %194 = sbr.rel (0) target = $region37
    $region36: #{tpu_custom_call.1} parent=1 // pred_region
      %s196 = ssub.s32 256, 256
      %197 = vsyncadd [#allocation5], %s196
      %s198 = sshll.u32 [#allocation8], 4
      %s199 = int_to_ptr.vmem [resolvable:$true] %s198
      %204 = dma.vmem_to_hbm [thread:$0]  %s199, 256, %s5, [#allocation5], 128, 128, 8
    $region37: #{tpu_custom_call.1} parent=1 // pred_fallthru
      _
    // Predicated region
    $region38: #{tpu_custom_call.1} parent=1 // pred_check
      _
    $region39: #{tpu_custom_call.1} parent=1 // pred_check_branch
      %206 = sbr.rel (0) target = $region41
    $region40: #{tpu_custom_call.1} parent=1 // pred_region
      %207 = dma.done [#allocation5], 256
    $region41: #{tpu_custom_call.1} parent=1 // pred_fallthru
      _
    %208 = vsyncpa [#allocation4], 1
    %209 = vsyncpa [#allocation7], 1
    %210 = vsyncpa [#allocation5], 1

</llo_original>
